<compile_context>
chip_gen: v6e
topology: v6e:2x2x1
jax: 0.10.0
libtpu: 0.0.40
codegen_flags: <defaults>
</compile_context>

<pallas_src>
import math

import jax
import jax.numpy as jnp
from jax.experimental import pallas as pl
from jax.experimental.pallas import tpu as pltpu

_TWO_PI = 2.0 * math.pi
_NUM_FREQS = 16
_OUT_CH = 2 * _NUM_FREQS          # 32
_MAX_TILE = 8192                  # lane-dense ceiling; write-BW saturates well before this
_MIN_PALLAS_OUT_BYTES = 1 << 20   # below this, plain XLA beats the fixed call overhead


def _sinusoidal_embedding_kernel(x_ref, freq_ref, o_ref):
    # x_ref:    (N, 1, T)    input tile, flattened spatial on the lane axis
    # freq_ref: (1, 16, 1)   log-frequencies (the module's buffer)
    # o_ref:    (N, 32, T)   [sin | cos] stacked along the sublane (channel) axis
    x = x_ref[...].astype(jnp.float32)
    omega = _TWO_PI * jnp.exp(freq_ref[...])            # (1, 16, 1) -- exp on EUP
    ang = omega * x                                      # broadcast -> (N, 16, T)
    o_ref[:, :_NUM_FREQS, :] = jnp.sin(ang).astype(o_ref.dtype)
    o_ref[:, _NUM_FREQS:, :] = jnp.cos(ang).astype(o_ref.dtype)


def make_frequencies():
    # torch.linspace(log(1.0), log(1000.0), 16).reshape(1, 16, 1, 1)
    return jnp.linspace(0.0, math.log(1000.0), _NUM_FREQS,
                        dtype=jnp.float32).reshape(1, _NUM_FREQS, 1, 1)


def _vmem_capacity_bytes():
    try:
        return int(pltpu.get_tpu_info().vmem_capacity_bytes)
    except Exception:
        return 64 << 20   # smallest per-TC physical VMEM across v5e/v6e/v7x


def _pick_tile(hw, n, cap_bytes):
    """Lane-dense tile (multiple of 128) sized from the per-generation VMEM budget."""
    if hw <= 128:
        return hw                                   # single full block (block dim == array dim)
    budget = max(cap_bytes // 4, 4 << 20)           # keep dbl-buffered working set <= ~1/4 VMEM
    per_lane = 2 * n * (1 + _OUT_CH) * 4            # double-buffered input + output bytes / lane
    tile = budget // max(per_lane, 1)
    tile = min(tile, _MAX_TILE)
    # Guarantee >= 2 grid steps so v7x megacore sharding and pipelining have work to split.
    half = -(-hw // 2)
    half = -(-half // 128) * 128
    tile = min(tile, half)
    return int(max(128, (tile // 128) * 128))


def sinusoidal_embedding(x_nchw, frequencies, *, out_dtype=jnp.float32, force_pallas=False):
    """x: (N, 1, H, W) f32, frequencies: (1, 16, 1, 1) f32 -> (N, 32, H, W) out_dtype."""
    N, C, H, W = x_nchw.shape
    assert C == 1, "SinusoidalEmbedding expects a single input channel"
    hw = H * W
    out_bytes = N * _OUT_CH * hw * jnp.dtype(out_dtype).itemsize

    if out_bytes < _MIN_PALLAS_OUT_BYTES and not force_pallas:
        # Tiny inputs (the usual DDM case): fixed pallas_call overhead dwarfs the HBM traffic.
        ang = _TWO_PI * jnp.exp(frequencies) * x_nchw
        return jnp.concatenate([jnp.sin(ang), jnp.cos(ang)], axis=1).astype(out_dtype)

    cap = _vmem_capacity_bytes()
    tile = _pick_tile(hw, N, cap)
    grid = (pl.cdiv(hw, tile),)

    # Explicit VMEM limit: cover the double-buffered footprint with headroom on every gen.
    footprint = 2 * N * (1 + _OUT_CH) * tile * 4
    vmem_limit = int(min(cap // 2, max(2 * footprint, 16 << 20)))

    x_flat = x_nchw.reshape(N, 1, hw)                   # pure view reshape (no transpose)
    freq = frequencies.reshape(1, _NUM_FREQS, 1).astype(jnp.float32)

    cost = pl.CostEstimate(
        flops=2 * _NUM_FREQS * N * hw,
        transcendentals=_OUT_CH * N * hw + _NUM_FREQS,
        bytes_accessed=4 * (N * hw + _NUM_FREQS)
        + N * _OUT_CH * hw * jnp.dtype(out_dtype).itemsize,
    )

    out_flat = pl.pallas_call(
        _sinusoidal_embedding_kernel,
        out_shape=jax.ShapeDtypeStruct((N, _OUT_CH, hw), out_dtype),
        grid_spec=pltpu.PrefetchScalarGridSpec(
            num_scalar_prefetch=0,
            grid=grid,
            in_specs=[
                pl.BlockSpec((N, 1, tile), lambda i: (0, 0, i)),
                pl.BlockSpec((1, _NUM_FREQS, 1), lambda i: (0, 0, 0)),
            ],
            out_specs=pl.BlockSpec((N, _OUT_CH, tile), lambda i: (0, 0, i)),
        ),
        compiler_params=pltpu.CompilerParams(
            dimension_semantics=("parallel",),
            vmem_limit_bytes=vmem_limit,
        ),
        cost_estimate=cost,
    )(x_flat, freq)

    return out_flat.reshape(N, _OUT_CH, H, W)           # pure view reshape back to NCHW


def _reference(x_nchw, frequencies):
    ang = _TWO_PI * jnp.exp(frequencies) * x_nchw       # (N, 16, H, W) via broadcast
    return jnp.concatenate([jnp.sin(ang), jnp.cos(ang)], axis=1)


if __name__ == "__main__":
    key = jax.random.PRNGKey(0)
    k0, k1 = jax.random.split(key)
    freqs = make_frequencies()

    # DDM-sized tiny input (N, 1, 16, 16); force the Pallas path so the kernel is exercised.
    N, H, W = 2, 16, 16
    x = jax.random.uniform(k0, (N, 1, H, W), dtype=jnp.float32)
    out = jax.block_until_ready(sinusoidal_embedding(x, freqs, force_pallas=True))
    assert out.shape == (N, _OUT_CH, H, W) and out.dtype == jnp.float32
    ref = _reference(x, freqs)
    assert jnp.allclose(out, ref, atol=1e-5, rtol=1e-5), float(jnp.max(jnp.abs(out - ref)))

    # Non-128-divisible spatial size: exercises cdiv grid + masked trailing partial block.
    x2 = jax.random.uniform(k1, (2, 1, 24, 24), dtype=jnp.float32)
    out2 = jax.block_until_ready(sinusoidal_embedding(x2, freqs, force_pallas=True))
    ref2 = _reference(x2, freqs)
    assert out2.shape == (2, _OUT_CH, 24, 24)
    assert jnp.allclose(out2, ref2, atol=1e-5, rtol=1e-5), float(jnp.max(jnp.abs(out2 - ref2)))

    print("KERNEL_OK")
</pallas_src>

<mosaic_0001>
module attributes {stable_mosaic.version = 11 : i64} {
  func.func @_sinusoidal_embedding_kernel(%arg0: i32, %arg1: memref<2x1x128xf32, #tpu.memory_space<vmem>>, %arg2: memref<1x16x1xf32, #tpu.memory_space<vmem>>, %arg3: memref<2x32x128xf32, #tpu.memory_space<vmem>>) attributes {dimension_semantics = [#tpu.dimension_semantics<parallel>], iteration_bounds = array<i64: 2>, scalar_prefetch = 0 : i64, scratch_operands = 0 : i64, tpu.core_type = #tpu.core_type<tc>, window_params = [{transform_indices = @transform_0, window_bounds = array<i64: 2, 1, 128>}, {pipeline_mode = #tpu.pipeline_mode<synchronous>, transform_indices = @transform_1, window_bounds = array<i64: 1, 16, 1>}, {transform_indices = @transform_2, window_bounds = array<i64: 2, 32, 128>}]} {
    %c0 = arith.constant 0 : index
    %c0_0 = arith.constant 0 : index
    %c0_1 = arith.constant 0 : index
    %0 = vector.load %arg1[%c0, %c0_0, %c0_1] : memref<2x1x128xf32, #tpu.memory_space<vmem>>, vector<2x1x128xf32>
    %c0_2 = arith.constant 0 : index
    %c0_3 = arith.constant 0 : index
    %c0_4 = arith.constant 0 : index
    %1 = vector.load %arg2[%c0_2, %c0_3, %c0_4] : memref<1x16x1xf32, #tpu.memory_space<vmem>>, vector<1x16x1xf32>
    %2 = math.exp %1 : vector<1x16x1xf32>
    %cst = arith.constant 6.28318548 : f32
    %3 = vector.broadcast %cst : f32 to vector<1x16x1xf32>
    %4 = arith.mulf %3, %2 : vector<1x16x1xf32>
    %5 = vector.broadcast %4 : vector<1x16x1xf32> to vector<2x16x128xf32>
    %6 = vector.broadcast %0 : vector<2x1x128xf32> to vector<2x16x128xf32>
    %7 = arith.mulf %5, %6 : vector<2x16x128xf32>
    %8 = math.sin %7 : vector<2x16x128xf32>
    %c0_5 = arith.constant 0 : index
    %c0_6 = arith.constant 0 : index
    %c0_7 = arith.constant 0 : index
    %9 = vector.load %arg3[%c0_5, %c0_6, %c0_7] : memref<2x32x128xf32, #tpu.memory_space<vmem>>, vector<2x16x128xf32>
    tpu.vector_store %arg3[%c0_5, %c0_6, %c0_7], %8 {strides = array<i32>} : memref<2x32x128xf32, #tpu.memory_space<vmem>>, vector<2x16x128xf32>,
    %10 = math.cos %7 : vector<2x16x128xf32>
    %c0_8 = arith.constant 0 : index
    %c16 = arith.constant 16 : index
    %c0_9 = arith.constant 0 : index
    %11 = vector.load %arg3[%c0_8, %c16, %c0_9] : memref<2x32x128xf32, #tpu.memory_space<vmem>>, vector<2x16x128xf32>
    tpu.vector_store %arg3[%c0_8, %c16, %c0_9], %10 {strides = array<i32>} : memref<2x32x128xf32, #tpu.memory_space<vmem>>, vector<2x16x128xf32>,
    return
  }
  func.func @transform_0(%arg0: i32) -> (i32, i32, i32) {
    %c0_i32 = arith.constant 0 : i32
    %c0_i32_0 = arith.constant 0 : i32
    %c0_i32_1 = arith.constant 0 : i32
    return %c0_i32, %c0_i32_0, %arg0 : i32, i32, i32
  }
  func.func @transform_1(%arg0: i32) -> (i32, i32, i32) {
    %c0_i32 = arith.constant 0 : i32
    %c0_i32_0 = arith.constant 0 : i32
    %c0_i32_1 = arith.constant 0 : i32
    %c0_i32_2 = arith.constant 0 : i32
    return %c0_i32, %c0_i32_0, %c0_i32_1 : i32, i32, i32
  }
  func.func @transform_2(%arg0: i32) -> (i32, i32, i32) {
    %c0_i32 = arith.constant 0 : i32
    %c0_i32_0 = arith.constant 0 : i32
    %c0_i32_1 = arith.constant 0 : i32
    return %c0_i32, %c0_i32_0, %arg0 : i32, i32, i32
  }
}

</mosaic_0001>

<llo_original>
// kernel: tpu_custom_call.1
$region0: #{tpu_custom_call.1}
  #allocation0 [shape = 'u32[]', space=smem, size = 0x4, offset = 0x4, fixed_abs, tag = 'smem constant byte address 0x4 - core index']
  #allocation1 [shape = 'u32[144,128]{1,0:T(1,128)}', space=vmem, size = 0x12000, scoped, tag = 'internal scratch']
  %s0 = inlined_call_operand.vmem [shape: f32[2,1,256], index: 0, kind: input, shape index: {}]
  %s1 = inlined_call_operand.vmem [shape: f32[1,16,1], index: 1, kind: input, shape index: {}]
  %s2 = inlined_call_operand.hbm [shape: f32[2,32,256], index: 2, kind: output, shape index: {}]
  %s3 = sld [smem:[#allocation0]]
  $region75: #{tpu_custom_call.1} parent=0
    _
  %s5 = ssub.s32 1, %s3
  %s6 = scalar_select 0, %s5, %s3
  $region1: #{tpu_custom_call.1} parent=0
    #allocation2 [shape = 'u8[2048]{0}', space=vmem, size = 0x800, scoped, tag = 'input window, operand 0']
    #allocation3 [shape = 'u8[65536]{0}', space=vmem, size = 0x10000, scoped, tag = 'output window, operand 0']
    #allocation4 [shape = 's32[2]{0}', space=sflag, size = 0x8, scoped, tag = 'scoped memory for tpu_custom_call.1']
    %7 = vsyncpa [#allocation4], 0
    %s8 = scalar_lea.sflag [#allocation4], 1
    %9 = vsyncpa %s8, 0
    loop: start=0, step=1, limit=4
    $region2: #{tpu_custom_call.1} parent=1 // loop_pre_header
      _
    $region3: #{tpu_custom_call.1} parent=1 // loop_header
      %s11 = sphi 0, %s15
      %p12 = scmp.ge.s32.totalorder %s11, 4
      %s21 = sphi 0, %s23
      %s24 = sphi 0, %s21
      %s25 = sphi 0, %s24
      %s41 = sphi 0, %s25
      %s45 = sphi 0, %s45
      %s47 = sphi 0, %s45
      %s48 = sphi 0, %s47
      %s62 = sphi 0, %s48
      %s68 = sphi 0, %s70
      %s71 = sphi 0, %s68
      %s72 = sphi 0, %s71
      %s88 = sphi 0, %s72
    $region4: #{tpu_custom_call.1} parent=1 // loop_header_branch
      %14 = sbr.rel (%p12) target = $region8
    $region5: #{tpu_custom_call.1} parent=1 // loop_body
      %s16 = ssub.s32 %s11, 1
      %s17 = ssub.s32 %s11, 2
      %s18 = sadd.s32 %s11, 1
      %s19 = ssub.s32 %s11, %s18
      %p20 = scmp.eq.s32.totalorder %s19, 0
      %s22 = sadd.s32 %s21, 1
      %s23 = scalar_select %p20, %s21, %s22
      %p26 = pneg %p20
      %p27 = scmp.eq.s32.totalorder %s11, 1
      %p28 = por %p26, %p27
      %p29 = scmp.ne.s32.totalorder %s21, %s24
      %p30 = scmp.eq.s32.totalorder %s11, 0
      %p31 = por %p29, %p30
      %p32 = scmp.ne.s32.totalorder %s21, %s24
      %p33 = scmp.eq.s32.totalorder %s16, 1
      %p34 = por %p32, %p33
      %p35 = scmp.ne.s32.totalorder %s24, %s25
      %p36 = scmp.eq.s32.totalorder %s16, 0
      %p37 = por %p35, %p36
      %p38 = scmp.ne.s32.totalorder %s24, %s25
      %p39 = scmp.eq.s32.totalorder %s17, 1
      %p40 = por %p38, %p39
      %p42 = scmp.ne.s32.totalorder %s25, %s41
      %p43 = scmp.eq.s32.totalorder %s17, 0
      %p44 = por %p42, %p43
      %s46 = sadd.s32 %s45, 1
      %p49 = scmp.eq.s32.totalorder %s11, 1
      %p50 = scmp.ne.s32.totalorder %s45, %s47
      %p51 = scmp.eq.s32.totalorder %s11, 0
      %p52 = por %p50, %p51
      %p53 = scmp.ne.s32.totalorder %s45, %s47
      %p54 = scmp.eq.s32.totalorder %s16, 1
      %p55 = por %p53, %p54
      %p56 = scmp.ne.s32.totalorder %s47, %s48
      %p57 = scmp.eq.s32.totalorder %s16, 0
      %p58 = por %p56, %p57
      %p59 = scmp.ne.s32.totalorder %s47, %s48
      %p60 = scmp.eq.s32.totalorder %s17, 1
      %p61 = por %p59, %p60
      %p63 = scmp.ne.s32.totalorder %s48, %s62
      %p64 = scmp.eq.s32.totalorder %s17, 0
      %p65 = por %p63, %p64
      %s66 = ssub.s32 %s11, %s18
      %p67 = scmp.eq.s32.totalorder %s66, 0
      %s69 = sadd.s32 %s68, 1
      %s70 = scalar_select %p67, %s68, %s69
      %p73 = pneg %p67
      %p74 = scmp.eq.s32.totalorder %s11, 1
      %p75 = por %p73, %p74
      %p76 = scmp.ne.s32.totalorder %s68, %s71
      %p77 = scmp.eq.s32.totalorder %s11, 0
      %p78 = por %p76, %p77
      %p79 = scmp.ne.s32.totalorder %s68, %s71
      %p80 = scmp.eq.s32.totalorder %s16, 1
      %p81 = por %p79, %p80
      %p82 = scmp.ne.s32.totalorder %s71, %s72
      %p83 = scmp.eq.s32.totalorder %s16, 0
      %p84 = por %p82, %p83
      %p85 = scmp.ne.s32.totalorder %s71, %s72
      %p86 = scmp.eq.s32.totalorder %s17, 1
      %p87 = por %p85, %p86
      %p89 = scmp.ne.s32.totalorder %s72, %s88
      %p90 = scmp.eq.s32.totalorder %s17, 0
      %p91 = por %p89, %p90
      %p92 = scmp.le.s32.totalorder 1, %s11
      %p93 = scmp.lt.s32.totalorder %s11, 3
      %p94 = pnand %p92, %p93
      %p95 = pneg %p94
      // Predicated region
      $region9: #{tpu_custom_call.1} parent=5 // pred_check
        _
      $region10: #{tpu_custom_call.1} parent=5 // pred_check_branch
        %97 = sbr.rel (%p94) target = $region12
      $region11: #{tpu_custom_call.1} parent=5 // pred_region
        %s98 = ssub.s32 %s11, 1
        // Predicated region
        $region13: #{tpu_custom_call.1} parent=11 // pred_check
          %p99 = pneg %p58
        $region14: #{tpu_custom_call.1} parent=11 // pred_check_branch
          %101 = sbr.rel (%p99) target = $region16
        $region15: #{tpu_custom_call.1} parent=11 // pred_region
          _
        $region16: #{tpu_custom_call.1} parent=11 // pred_fallthru
          _
      $region12: #{tpu_custom_call.1} parent=5 // pred_fallthru
        _
      %p102 = scmp.lt.s32.totalorder %s11, 2
      // Predicated region
      $region17: #{tpu_custom_call.1} parent=5 // pred_check
        %p103 = pneg %p102
      $region18: #{tpu_custom_call.1} parent=5 // pred_check_branch
        %105 = sbr.rel (%p103) target = $region20
      $region19: #{tpu_custom_call.1} parent=5 // pred_region
        // Predicated region
        $region21: #{tpu_custom_call.1} parent=19 // pred_check
          %p106 = pneg %p31
        $region22: #{tpu_custom_call.1} parent=19 // pred_check_branch
          %108 = sbr.rel (%p106) target = $region24
        $region23: #{tpu_custom_call.1} parent=19 // pred_region
          %s109 = sand.u32 %s21, 1
          %s110 = sand.u32 %s21, 1
          %s111 = smul.addr %s110, 2
          %s112 = scalar_lea.vmem [#allocation2], %s111
          %s113 = scalar_lea.vmem %s0, %s11
          // Predicated region
          $region25: #{tpu_custom_call.1} parent=23 // pred_check
            _
          $region26: #{tpu_custom_call.1} parent=23 // pred_check_branch
            %115 = sbr.rel (0) target = $region28
          $region27: #{tpu_custom_call.1} parent=23 // pred_region
            // Predicated region
            $region29: #{tpu_custom_call.1} parent=27 // pred_check
              _
            $region30: #{tpu_custom_call.1} parent=27 // pred_check_branch
              %117 = sbr.rel target = $region32
            $region31: #{tpu_custom_call.1} parent=27 // pred_region
              // Predicated region
              $region44: #{tpu_custom_call.1} parent=31 // pred_check
                _
              $region45: #{tpu_custom_call.1} parent=31 // pred_check_branch
                %135 = sbr.rel (0) target = $region47
              $region46: #{tpu_custom_call.1} parent=31 // pred_region
                %s137 = ssub.s32 2, 1
                loop: start=0, step=1, limit=1
                $region48: #{tpu_custom_call.1} parent=46 // loop_pre_header
                  _
                $region49: #{tpu_custom_call.1} parent=46 // loop_header
                  %s139 = sphi 0, %s143
                  %p140 = scmp.ge.s32.totalorder %s139, 1
                  %s144 = sphi %s113, %s113
                  %s145 = sphi %s112, %s112
                $region50: #{tpu_custom_call.1} parent=46 // loop_header_branch
                  %142 = sbr.rel (%p140) target = $region54
                $region51: #{tpu_custom_call.1} parent=46 // loop_body
                  %v146 = vld [vmem:[%s144] sm:%s137]
                  %147 = vst [vmem:[%s145] sm:%s137] %v146
                  %v148 = vld [vmem:[%s144 + $0x2] sm:%s137]
                  %149 = vst [vmem:[%s145 + $0x1] sm:%s137] %v148
                $region52: #{tpu_custom_call.1} parent=46 // loop_footer
                  %s143 = sadd.s32 1, %s139
                $region53: #{tpu_custom_call.1} parent=46 // loop_footer_branch
                  %138 = sbr.rel target = $region49
                $region54: #{tpu_custom_call.1} parent=46 // loop_exit
                  _
              $region47: #{tpu_custom_call.1} parent=31 // pred_fallthru
                _
            $region32: #{tpu_custom_call.1} parent=27 // pred_fallthru
              _
            // Predicated region
            $region33: #{tpu_custom_call.1} parent=27 // pred_check
              _
            $region34: #{tpu_custom_call.1} parent=27 // pred_check_branch
              %119 = sbr.rel (0) target = $region36
            $region35: #{tpu_custom_call.1} parent=27 // pred_region
              %s121 = ssub.s32 2, 1
              loop: start=0, step=1, limit=1
              $region37: #{tpu_custom_call.1} parent=35 // loop_pre_header
                _
              $region38: #{tpu_custom_call.1} parent=35 // loop_header
                %s123 = sphi 0, %s127
                %p124 = scmp.ge.s32.totalorder %s123, 1
                %s128 = sphi %s113, %s113
                %s129 = sphi %s112, %s112
              $region39: #{tpu_custom_call.1} parent=35 // loop_header_branch
                %126 = sbr.rel (%p124) target = $region43
              $region40: #{tpu_custom_call.1} parent=35 // loop_body
                %v130 = vld [vmem:[%s128] sm:%s121]
                %131 = vst [vmem:[%s129] sm:%s121] %v130
                %v132 = vld [vmem:[%s128 + $0x2] sm:%s121]
                %133 = vst [vmem:[%s129 + $0x1] sm:%s121] %v132
              $region41: #{tpu_custom_call.1} parent=35 // loop_footer
                %s127 = sadd.s32 1, %s123
              $region42: #{tpu_custom_call.1} parent=35 // loop_footer_branch
                %122 = sbr.rel target = $region38
              $region43: #{tpu_custom_call.1} parent=35 // loop_exit
                _
            $region36: #{tpu_custom_call.1} parent=27 // pred_fallthru
              _
          $region28: #{tpu_custom_call.1} parent=23 // pred_fallthru
            _
          %150 = vnop
        $region24: #{tpu_custom_call.1} parent=19 // pred_fallthru
          _
      $region20: #{tpu_custom_call.1} parent=5 // pred_fallthru
        _
      %p151 = scmp.le.s32.totalorder 1, %s11
      %p152 = scmp.lt.s32.totalorder %s11, 3
      %p153 = pnand %p151, %p152
      %p154 = pneg %p153
      // Predicated region
      $region55: #{tpu_custom_call.1} parent=5 // pred_check
        _
      $region56: #{tpu_custom_call.1} parent=5 // pred_check_branch
        %156 = sbr.rel (%p153) target = $region58
      $region57: #{tpu_custom_call.1} parent=5 // pred_region
        %s157 = ssub.s32 %s11, 1
        %s158 = sand.u32 %s24, 1
        %s159 = sand.u32 %s24, 1
        %s160 = smul.addr %s159, 2
        %s161 = scalar_lea.vmem [#allocation2], %s160
        // Predicated region
        $region59: #{tpu_custom_call.1} parent=57 // pred_check
          %p162 = pneg %p37
        $region60: #{tpu_custom_call.1} parent=57 // pred_check_branch
          %164 = sbr.rel (%p162) target = $region62
        $region61: #{tpu_custom_call.1} parent=57 // pred_region
          _
        $region62: #{tpu_custom_call.1} parent=57 // pred_fallthru
          _
        %s165 = sand.u32 %s24, 1
        %s166 = sand.u32 %s24, 1
        %s167 = smul.addr %s166, 2
        %s168 = scalar_lea.vmem [#allocation2], %s167
        %p169 = pneg %p37
        %p170 = pneg %p34
        %p171 = pneg %p58
        %p172 = pneg %p55
        %p173 = pneg %p84
        %p174 = pneg %p81
        %s175 = sand.u32 %s71, 1
        %s176 = scalar_lea.sflag [#allocation4], %s175
        %s177 = sand.u32 %s71, 1
        %s178 = smul.addr %s177, 64
        %s179 = scalar_lea.vmem [#allocation3], %s178
        %v180 = vld [vmem:[%s161] sm:$0x1]
        %v181 = vld [vmem:[%s161 + $0x1] sm:$0x1]
        %v182 = vld [vmem:[%s1] sm:$0xff]
        %v183 = vld [vmem:[%s1 + $0x8] sm:$0xff]
        %v184 = vmul.f32 %v182, 1.442695
        %v185 = vpow.pop %v184
        %v186 = vmul.f32 %v183, 1.442695
        %v187 = vpow.pop %v186
        %v188 = vmul.f32 %v185, 6.2831855
        %v189 = vmul.f32 %v187, 6.2831855
        %191 = vset.pattern.permute.xlu0 0
        %192 = vperm.xlu0 %191, %v188
        %v193 = vpop.permute.xlu0 %192
        %196 = vset.pattern.permute.xlu0 0
        %197 = vperm.xlu0 %196, %v189
        %v198 = vpop.permute.xlu0 %197
        %v202 = vlaneseq
        %v203 = vshrl.u32 %v202, 7
        %v204 = vsub.s32 0, %v203
        %v205 = vrot.slane %v180, %v204
        %v206 = vlaneseq
        %v207 = vshrl.u32 %v206, 7
        %v208 = vsub.s32 0, %v207
        %v209 = vrot.slane %v181, %v208
        %v212 = vmul.f32 %v193, %v205
        %v213 = vmul.f32 %v198, %v205
        %v214 = vmul.f32 %v193, %v209
        %v215 = vmul.f32 %v198, %v209
        %v216 = vand.u32 2147483647, %v212
        %vm217 = vcmp.le.f32.partialorder %v216, 0.7853982
        %vm218 = vcmp.lt.s32.totalorder %v212, 0
        %v219 = vand.u32 %v212, 2139095040
        %v220 = vshrl.u32 %v219, 23
        %v221 = vsub.s32 %v220, 127
        %v222 = vand.u32 2147483647, %v212
        %v223 = vand.u32 %v222, 8388607
        %v224 = vor.u32 %v223, 8388608
        %v225 = vsub.s32 0, %v224
        %v226 = vadd.s32 %v221, 1
        %vm227 = vcmp.gt.s32.totalorder %v226, 0
        %v228 = vsel %vm227, %v226, 0
        %v229 = vshrl.u32 %v228, 5
        %v230 = vand.u32 %v228, 31
        %v231 = vsub.s32 32, %v230
        %v232 = vshrl.u32 683565275, %v231
        %v233 = vshll.u32 683565275, %v230
        %v234 = vshrl.u32 2475754826, %v231
        %v235 = vor.u32 %v233, %v234
        %v236 = vshll.u32 2475754826, %v230
        %v237 = vshrl.u32 2131351028, %v231
        %v238 = vor.u32 %v236, %v237
        %v239 = vshll.u32 2131351028, %v230
        %v240 = vshrl.u32 2102212464, %v231
        %v241 = vor.u32 %v239, %v240
        %v242 = vshll.u32 2102212464, %v230
        %v243 = vshrl.u32 920167782, %v231
        %v244 = vor.u32 %v242, %v243
        %v245 = vshll.u32 920167782, %v230
        %v246 = vshrl.u32 1326507024, %v231
        %v247 = vor.u32 %v245, %v246
        %vm248 = vcmp.lt.s32.totalorder %v229, 1
        %vm249 = vcmp.lt.s32.totalorder %v229, 2
        %vm250 = vcmp.lt.s32.totalorder %v229, 3
        %vm251 = vcmp.lt.s32.totalorder %v229, 4
        %v252 = vsel %vm248, %v232, %v235
        %v253 = vsel %vm251, %v241, 2102212464
        %v254 = vsel %vm250, %v238, %v253
        %v255 = vsel %vm249, %v252, %v254
        %v256 = vsel %vm248, %v235, %v238
        %v257 = vsel %vm251, %v244, 920167782
        %v258 = vsel %vm250, %v241, %v257
        %v259 = vsel %vm249, %v256, %v258
        %v260 = vsel %vm248, %v238, %v241
        %v261 = vsel %vm251, %v247, 1326507024
        %v262 = vsel %vm250, %v244, %v261
        %v263 = vsel %vm249, %v260, %v262
        %v264 = vshll.u32 %v224, 8
        %v265 = vmul.u32.u64.compose %v264, %v263
        %v266 = vextract.low.u32 %v265
        %v267 = vextract.high.u32 %v265
        %v268 = vmul.u32.u64.compose %v264, %v259
        %v269 = vextract.low.u32 %v268
        %v270 = vextract.high.u32 %v268
        %v271 = vmul.u32 %v264, %v255
        %v272 = vadd.s32 %v267, %v269
        %vm273 = vc.u32 %v267, %v269
        %v274 = vadd.s32 %v270, 1
        %v275 = vsel %vm273, %v274, %v270
        %v276 = vadd.s32 %v271, %v275
        %v277 = vadd.s32 %v276, 536870912
        %v278 = vshrl.u32 %v277, 30
        %v279 = vshll.u32 %v278, 30
        %v280 = vsub.s32 %v276, %v279
        %vm281 = vcmp.lt.s32.totalorder %v280, 0
        %v282 = vsub.s32 0, %v280
        %v283 = vsel %vm281, %v282, %v280
        %v284 = vclz %v283
        %v285 = vsub.s32 %v284, 2
        %vm286 = vcmp.gt.s32.totalorder 0, %v285
        %v287 = vsel %vm286, 0, %v285
        %v288 = vsub.s32 32, %v287
        %v289 = vshll.u32 %v280, %v287
        %v290 = vshrl.u32 %v272, %v288
        %v291 = vor.u32 %v289, %v290
        %v292 = vsub.s32 4294967266, %v287
        %v293 = vadd.s32 %v292, 127
        %v294 = vshll.u32 %v293, 23
        %v295 = vor.u32 4788187, %v294
        %v296 = vand.u32 2147483647, %v295
        %v298 = vcvt.s32.f32 %v291
        %v299 = vmul.f32 %v298, %v296
        %v300 = vxor.u32 %v299, 2147483648
        %v301 = vsel %vm218, %v300, %v299
        %v302 = vsub.s32 4, %v278
        %v303 = vsel %vm218, %v302, %v278
        %v304 = vsel %vm217, %v212, %v301
        %v305 = vsel %vm217, 0, %v303
        %v306 = vcosq.f32.pop %v304
        %v307 = vsinq.f32.pop %v304
        %vm308 = vweird.f32 %v212
        %v309 = vadd.s32 %v305, 3
        %v310 = vand.u32 %v309, 3
        %vm311 = vcmp.lt.s32.totalorder %v310, 2
        %vm312 = vcmp.eq.s32.totalorder %v310, 0
        %v313 = vxor.u32 %v307, 2147483648
        %v314 = vsel %vm312, %v306, %v313
        %vm315 = vcmp.eq.s32.totalorder %v310, 2
        %v316 = vxor.u32 %v306, 2147483648
        %v317 = vsel %vm315, %v316, %v307
        %v318 = vsel %vm311, %v314, %v317
        %v319 = vsel %vm308, nan, %v318
        %v320 = vand.u32 2147483647, %v213
        %vm321 = vcmp.le.f32.partialorder %v320, 0.7853982
        %vm322 = vcmp.lt.s32.totalorder %v213, 0
        %v323 = vand.u32 %v213, 2139095040
        %v324 = vshrl.u32 %v323, 23
        %v325 = vsub.s32 %v324, 127
        %v326 = vand.u32 2147483647, %v213
        %v327 = vand.u32 %v326, 8388607
        %v328 = vor.u32 %v327, 8388608
        %v329 = vsub.s32 0, %v328
        %v330 = vadd.s32 %v325, 1
        %vm331 = vcmp.gt.s32.totalorder %v330, 0
        %v332 = vsel %vm331, %v330, 0
        %v333 = vshrl.u32 %v332, 5
        %v334 = vand.u32 %v332, 31
        %v335 = vsub.s32 32, %v334
        %v336 = vshrl.u32 683565275, %v335
        %v337 = vshll.u32 683565275, %v334
        %v338 = vshrl.u32 2475754826, %v335
        %v339 = vor.u32 %v337, %v338
        %v340 = vshll.u32 2475754826, %v334
        %v341 = vshrl.u32 2131351028, %v335
        %v342 = vor.u32 %v340, %v341
        %v343 = vshll.u32 2131351028, %v334
        %v344 = vshrl.u32 2102212464, %v335
        %v345 = vor.u32 %v343, %v344
        %v346 = vshll.u32 2102212464, %v334
        %v347 = vshrl.u32 920167782, %v335
        %v348 = vor.u32 %v346, %v347
        %v349 = vshll.u32 920167782, %v334
        %v350 = vshrl.u32 1326507024, %v335
        %v351 = vor.u32 %v349, %v350
        %vm352 = vcmp.lt.s32.totalorder %v333, 1
        %vm353 = vcmp.lt.s32.totalorder %v333, 2
        %vm354 = vcmp.lt.s32.totalorder %v333, 3
        %vm355 = vcmp.lt.s32.totalorder %v333, 4
        %v356 = vsel %vm352, %v336, %v339
        %v357 = vsel %vm355, %v345, 2102212464
        %v358 = vsel %vm354, %v342, %v357
        %v359 = vsel %vm353, %v356, %v358
        %v360 = vsel %vm352, %v339, %v342
        %v361 = vsel %vm355, %v348, 920167782
        %v362 = vsel %vm354, %v345, %v361
        %v363 = vsel %vm353, %v360, %v362
        %v364 = vsel %vm352, %v342, %v345
        %v365 = vsel %vm355, %v351, 1326507024
        %v366 = vsel %vm354, %v348, %v365
        %v367 = vsel %vm353, %v364, %v366
        %v368 = vshll.u32 %v328, 8
        %v369 = vmul.u32.u64.compose %v368, %v367
        %v370 = vextract.low.u32 %v369
        %v371 = vextract.high.u32 %v369
        %v372 = vmul.u32.u64.compose %v368, %v363
        %v373 = vextract.low.u32 %v372
        %v374 = vextract.high.u32 %v372
        %v375 = vmul.u32 %v368, %v359
        %v376 = vadd.s32 %v371, %v373
        %vm377 = vc.u32 %v371, %v373
        %v378 = vadd.s32 %v374, 1
        %v379 = vsel %vm377, %v378, %v374
        %v380 = vadd.s32 %v375, %v379
        %v381 = vadd.s32 %v380, 536870912
        %v382 = vshrl.u32 %v381, 30
        %v383 = vshll.u32 %v382, 30
        %v384 = vsub.s32 %v380, %v383
        %vm385 = vcmp.lt.s32.totalorder %v384, 0
        %v386 = vsub.s32 0, %v384
        %v387 = vsel %vm385, %v386, %v384
        %v388 = vclz %v387
        %v389 = vsub.s32 %v388, 2
        %vm390 = vcmp.gt.s32.totalorder 0, %v389
        %v391 = vsel %vm390, 0, %v389
        %v392 = vsub.s32 32, %v391
        %v393 = vshll.u32 %v384, %v391
        %v394 = vshrl.u32 %v376, %v392
        %v395 = vor.u32 %v393, %v394
        %v396 = vsub.s32 4294967266, %v391
        %v397 = vadd.s32 %v396, 127
        %v398 = vshll.u32 %v397, 23
        %v399 = vor.u32 4788187, %v398
        %v400 = vand.u32 2147483647, %v399
        %v402 = vcvt.s32.f32 %v395
        %v403 = vmul.f32 %v402, %v400
        %v404 = vxor.u32 %v403, 2147483648
        %v405 = vsel %vm322, %v404, %v403
        %v406 = vsub.s32 4, %v382
        %v407 = vsel %vm322, %v406, %v382
        %v408 = vsel %vm321, %v213, %v405
        %v409 = vsel %vm321, 0, %v407
        %v410 = vcosq.f32.pop %v408
        %v411 = vsinq.f32.pop %v408
        %vm412 = vweird.f32 %v213
        %v413 = vadd.s32 %v409, 3
        %v414 = vand.u32 %v413, 3
        %vm415 = vcmp.lt.s32.totalorder %v414, 2
        %vm416 = vcmp.eq.s32.totalorder %v414, 0
        %v417 = vxor.u32 %v411, 2147483648
        %v418 = vsel %vm416, %v410, %v417
        %vm419 = vcmp.eq.s32.totalorder %v414, 2
        %v420 = vxor.u32 %v410, 2147483648
        %v421 = vsel %vm419, %v420, %v411
        %v422 = vsel %vm415, %v418, %v421
        %v423 = vsel %vm412, nan, %v422
        %v424 = vand.u32 2147483647, %v214
        %vm425 = vcmp.le.f32.partialorder %v424, 0.7853982
        %vm426 = vcmp.lt.s32.totalorder %v214, 0
        %v427 = vand.u32 %v214, 2139095040
        %v428 = vshrl.u32 %v427, 23
        %v429 = vsub.s32 %v428, 127
        %v430 = vand.u32 2147483647, %v214
        %v431 = vand.u32 %v430, 8388607
        %v432 = vor.u32 %v431, 8388608
        %v433 = vsub.s32 0, %v432
        %v434 = vadd.s32 %v429, 1
        %vm435 = vcmp.gt.s32.totalorder %v434, 0
        %v436 = vsel %vm435, %v434, 0
        %v437 = vshrl.u32 %v436, 5
        %v438 = vand.u32 %v436, 31
        %v439 = vsub.s32 32, %v438
        %v440 = vshrl.u32 683565275, %v439
        %v441 = vshll.u32 683565275, %v438
        %v442 = vshrl.u32 2475754826, %v439
        %v443 = vor.u32 %v441, %v442
        %v444 = vshll.u32 2475754826, %v438
        %v445 = vshrl.u32 2131351028, %v439
        %v446 = vor.u32 %v444, %v445
        %v447 = vshll.u32 2131351028, %v438
        %v448 = vshrl.u32 2102212464, %v439
        %v449 = vor.u32 %v447, %v448
        %v450 = vshll.u32 2102212464, %v438
        %v451 = vshrl.u32 920167782, %v439
        %v452 = vor.u32 %v450, %v451
        %v453 = vshll.u32 920167782, %v438
        %v454 = vshrl.u32 1326507024, %v439
        %v455 = vor.u32 %v453, %v454
        %vm456 = vcmp.lt.s32.totalorder %v437, 1
        %vm457 = vcmp.lt.s32.totalorder %v437, 2
        %vm458 = vcmp.lt.s32.totalorder %v437, 3
        %vm459 = vcmp.lt.s32.totalorder %v437, 4
        %v460 = vsel %vm456, %v440, %v443
        %v461 = vsel %vm459, %v449, 2102212464
        %v462 = vsel %vm458, %v446, %v461
        %v463 = vsel %vm457, %v460, %v462
        %v464 = vsel %vm456, %v443, %v446
        %v465 = vsel %vm459, %v452, 920167782
        %v466 = vsel %vm458, %v449, %v465
        %v467 = vsel %vm457, %v464, %v466
        %v468 = vsel %vm456, %v446, %v449
        %v469 = vsel %vm459, %v455, 1326507024
        %v470 = vsel %vm458, %v452, %v469
        %v471 = vsel %vm457, %v468, %v470
        %v472 = vshll.u32 %v432, 8
        %v473 = vmul.u32.u64.compose %v472, %v471
        %v474 = vextract.low.u32 %v473
        %v475 = vextract.high.u32 %v473
        %v476 = vmul.u32.u64.compose %v472, %v467
        %v477 = vextract.low.u32 %v476
        %v478 = vextract.high.u32 %v476
        %v479 = vmul.u32 %v472, %v463
        %v480 = vadd.s32 %v475, %v477
        %vm481 = vc.u32 %v475, %v477
        %v482 = vadd.s32 %v478, 1
        %v483 = vsel %vm481, %v482, %v478
        %v484 = vadd.s32 %v479, %v483
        %v485 = vadd.s32 %v484, 536870912
        %v486 = vshrl.u32 %v485, 30
        %v487 = vshll.u32 %v486, 30
        %v488 = vsub.s32 %v484, %v487
        %vm489 = vcmp.lt.s32.totalorder %v488, 0
        %v490 = vsub.s32 0, %v488
        %v491 = vsel %vm489, %v490, %v488
        %v492 = vclz %v491
        %v493 = vsub.s32 %v492, 2
        %vm494 = vcmp.gt.s32.totalorder 0, %v493
        %v495 = vsel %vm494, 0, %v493
        %v496 = vsub.s32 32, %v495
        %v497 = vshll.u32 %v488, %v495
        %v498 = vshrl.u32 %v480, %v496
        %v499 = vor.u32 %v497, %v498
        %v500 = vsub.s32 4294967266, %v495
        %v501 = vadd.s32 %v500, 127
        %v502 = vshll.u32 %v501, 23
        %v503 = vor.u32 4788187, %v502
        %v504 = vand.u32 2147483647, %v503
        %v506 = vcvt.s32.f32 %v499
        %v507 = vmul.f32 %v506, %v504
        %v508 = vxor.u32 %v507, 2147483648
        %v509 = vsel %vm426, %v508, %v507
        %v510 = vsub.s32 4, %v486
        %v511 = vsel %vm426, %v510, %v486
        %v512 = vsel %vm425, %v214, %v509
        %v513 = vsel %vm425, 0, %v511
        %v514 = vcosq.f32.pop %v512
        %v515 = vsinq.f32.pop %v512
        %vm516 = vweird.f32 %v214
        %v517 = vadd.s32 %v513, 3
        %v518 = vand.u32 %v517, 3
        %vm519 = vcmp.lt.s32.totalorder %v518, 2
        %vm520 = vcmp.eq.s32.totalorder %v518, 0
        %v521 = vxor.u32 %v515, 2147483648
        %v522 = vsel %vm520, %v514, %v521
        %vm523 = vcmp.eq.s32.totalorder %v518, 2
        %v524 = vxor.u32 %v514, 2147483648
        %v525 = vsel %vm523, %v524, %v515
        %v526 = vsel %vm519, %v522, %v525
        %v527 = vsel %vm516, nan, %v526
        %v528 = vand.u32 2147483647, %v215
        %vm529 = vcmp.le.f32.partialorder %v528, 0.7853982
        %vm530 = vcmp.lt.s32.totalorder %v215, 0
        %v531 = vand.u32 %v215, 2139095040
        %v532 = vshrl.u32 %v531, 23
        %v533 = vsub.s32 %v532, 127
        %v534 = vand.u32 2147483647, %v215
        %v535 = vand.u32 %v534, 8388607
        %v536 = vor.u32 %v535, 8388608
        %v537 = vsub.s32 0, %v536
        %v538 = vadd.s32 %v533, 1
        %vm539 = vcmp.gt.s32.totalorder %v538, 0
        %v540 = vsel %vm539, %v538, 0
        %v541 = vshrl.u32 %v540, 5
        %v542 = vand.u32 %v540, 31
        %v543 = vsub.s32 32, %v542
        %v544 = vshrl.u32 683565275, %v543
        %v545 = vshll.u32 683565275, %v542
        %v546 = vshrl.u32 2475754826, %v543
        %v547 = vor.u32 %v545, %v546
        %v548 = vshll.u32 2475754826, %v542
        %v549 = vshrl.u32 2131351028, %v543
        %v550 = vor.u32 %v548, %v549
        %v551 = vshll.u32 2131351028, %v542
        %v552 = vshrl.u32 2102212464, %v543
        %v553 = vor.u32 %v551, %v552
        %v554 = vshll.u32 2102212464, %v542
        %v555 = vshrl.u32 920167782, %v543
        %v556 = vor.u32 %v554, %v555
        %v557 = vshll.u32 920167782, %v542
        %v558 = vshrl.u32 1326507024, %v543
        %v559 = vor.u32 %v557, %v558
        %vm560 = vcmp.lt.s32.totalorder %v541, 1
        %vm561 = vcmp.lt.s32.totalorder %v541, 2
        %vm562 = vcmp.lt.s32.totalorder %v541, 3
        %vm563 = vcmp.lt.s32.totalorder %v541, 4
        %v564 = vsel %vm560, %v544, %v547
        %v565 = vsel %vm563, %v553, 2102212464
        %v566 = vsel %vm562, %v550, %v565
        %v567 = vsel %vm561, %v564, %v566
        %v568 = vsel %vm560, %v547, %v550
        %v569 = vsel %vm563, %v556, 920167782
        %v570 = vsel %vm562, %v553, %v569
        %v571 = vsel %vm561, %v568, %v570
        %v572 = vsel %vm560, %v550, %v553
        %v573 = vsel %vm563, %v559, 1326507024
        %v574 = vsel %vm562, %v556, %v573
        %v575 = vsel %vm561, %v572, %v574
        %v576 = vshll.u32 %v536, 8
        %v577 = vmul.u32.u64.compose %v576, %v575
        %v578 = vextract.low.u32 %v577
        %v579 = vextract.high.u32 %v577
        %v580 = vmul.u32.u64.compose %v576, %v571
        %v581 = vextract.low.u32 %v580
        %v582 = vextract.high.u32 %v580
        %v583 = vmul.u32 %v576, %v567
        %v584 = vadd.s32 %v579, %v581
        %vm585 = vc.u32 %v579, %v581
        %v586 = vadd.s32 %v582, 1
        %v587 = vsel %vm585, %v586, %v582
        %v588 = vadd.s32 %v583, %v587
        %v589 = vadd.s32 %v588, 536870912
        %v590 = vshrl.u32 %v589, 30
        %v591 = vshll.u32 %v590, 30
        %v592 = vsub.s32 %v588, %v591
        %vm593 = vcmp.lt.s32.totalorder %v592, 0
        %v594 = vsub.s32 0, %v592
        %v595 = vsel %vm593, %v594, %v592
        %v596 = vclz %v595
        %v597 = vsub.s32 %v596, 2
        %vm598 = vcmp.gt.s32.totalorder 0, %v597
        %v599 = vsel %vm598, 0, %v597
        %v600 = vsub.s32 32, %v599
        %v601 = vshll.u32 %v592, %v599
        %v602 = vshrl.u32 %v584, %v600
        %v603 = vor.u32 %v601, %v602
        %v604 = vsub.s32 4294967266, %v599
        %v605 = vadd.s32 %v604, 127
        %v606 = vshll.u32 %v605, 23
        %v607 = vor.u32 4788187, %v606
        %v608 = vand.u32 2147483647, %v607
        %v610 = vcvt.s32.f32 %v603
        %v611 = vmul.f32 %v610, %v608
        %v612 = vxor.u32 %v611, 2147483648
        %v613 = vsel %vm530, %v612, %v611
        %v614 = vsub.s32 4, %v590
        %v615 = vsel %vm530, %v614, %v590
        %v616 = vsel %vm529, %v215, %v613
        %v617 = vsel %vm529, 0, %v615
        %v618 = vcosq.f32.pop %v616
        %v619 = vsinq.f32.pop %v616
        %vm620 = vweird.f32 %v215
        %v621 = vadd.s32 %v617, 3
        %v622 = vand.u32 %v621, 3
        %vm623 = vcmp.lt.s32.totalorder %v622, 2
        %vm624 = vcmp.eq.s32.totalorder %v622, 0
        %v625 = vxor.u32 %v619, 2147483648
        %v626 = vsel %vm624, %v618, %v625
        %vm627 = vcmp.eq.s32.totalorder %v622, 2
        %v628 = vxor.u32 %v618, 2147483648
        %v629 = vsel %vm627, %v628, %v619
        %v630 = vsel %vm623, %v626, %v629
        %v631 = vsel %vm620, nan, %v630
        %632 = vst [vmem:[%s179] sm:$0xff] %v319
        %633 = vst [vmem:[%s179 + $0x8] sm:$0xff] %v423
        %634 = vst [vmem:[%s179 + $0x20] sm:$0xff] %v527
        %635 = vst [vmem:[%s179 + $0x28] sm:$0xff] %v631
        %v636 = vand.u32 2147483647, %v212
        %vm637 = vcmp.le.f32.partialorder %v636, 0.7853982
        %vm638 = vcmp.lt.s32.totalorder %v212, 0
        %v639 = vand.u32 %v212, 2139095040
        %v640 = vshrl.u32 %v639, 23
        %v641 = vsub.s32 %v640, 127
        %v642 = vand.u32 2147483647, %v212
        %v643 = vand.u32 %v642, 8388607
        %v644 = vor.u32 %v643, 8388608
        %v645 = vsub.s32 0, %v644
        %v646 = vadd.s32 %v641, 1
        %vm647 = vcmp.gt.s32.totalorder %v646, 0
        %v648 = vsel %vm647, %v646, 0
        %v649 = vshrl.u32 %v648, 5
        %v650 = vand.u32 %v648, 31
        %v651 = vsub.s32 32, %v650
        %v652 = vshrl.u32 683565275, %v651
        %v653 = vshll.u32 683565275, %v650
        %v654 = vshrl.u32 2475754826, %v651
        %v655 = vor.u32 %v653, %v654
        %v656 = vshll.u32 2475754826, %v650
        %v657 = vshrl.u32 2131351028, %v651
        %v658 = vor.u32 %v656, %v657
        %v659 = vshll.u32 2131351028, %v650
        %v660 = vshrl.u32 2102212464, %v651
        %v661 = vor.u32 %v659, %v660
        %v662 = vshll.u32 2102212464, %v650
        %v663 = vshrl.u32 920167782, %v651
        %v664 = vor.u32 %v662, %v663
        %v665 = vshll.u32 920167782, %v650
        %v666 = vshrl.u32 1326507024, %v651
        %v667 = vor.u32 %v665, %v666
        %vm668 = vcmp.lt.s32.totalorder %v649, 1
        %vm669 = vcmp.lt.s32.totalorder %v649, 2
        %vm670 = vcmp.lt.s32.totalorder %v649, 3
        %vm671 = vcmp.lt.s32.totalorder %v649, 4
        %v672 = vsel %vm668, %v652, %v655
        %v673 = vsel %vm671, %v661, 2102212464
        %v674 = vsel %vm670, %v658, %v673
        %v675 = vsel %vm669, %v672, %v674
        %v676 = vsel %vm668, %v655, %v658
        %v677 = vsel %vm671, %v664, 920167782
        %v678 = vsel %vm670, %v661, %v677
        %v679 = vsel %vm669, %v676, %v678
        %v680 = vsel %vm668, %v658, %v661
        %v681 = vsel %vm671, %v667, 1326507024
        %v682 = vsel %vm670, %v664, %v681
        %v683 = vsel %vm669, %v680, %v682
        %v684 = vshll.u32 %v644, 8
        %v685 = vmul.u32.u64.compose %v684, %v683
        %v686 = vextract.low.u32 %v685
        %v687 = vextract.high.u32 %v685
        %v688 = vmul.u32.u64.compose %v684, %v679
        %v689 = vextract.low.u32 %v688
        %v690 = vextract.high.u32 %v688
        %v691 = vmul.u32 %v684, %v675
        %v692 = vadd.s32 %v687, %v689
        %vm693 = vc.u32 %v687, %v689
        %v694 = vadd.s32 %v690, 1
        %v695 = vsel %vm693, %v694, %v690
        %v696 = vadd.s32 %v691, %v695
        %v697 = vadd.s32 %v696, 536870912
        %v698 = vshrl.u32 %v697, 30
        %v699 = vshll.u32 %v698, 30
        %v700 = vsub.s32 %v696, %v699
        %vm701 = vcmp.lt.s32.totalorder %v700, 0
        %v702 = vsub.s32 0, %v700
        %v703 = vsel %vm701, %v702, %v700
        %v704 = vclz %v703
        %v705 = vsub.s32 %v704, 2
        %vm706 = vcmp.gt.s32.totalorder 0, %v705
        %v707 = vsel %vm706, 0, %v705
        %v708 = vsub.s32 32, %v707
        %v709 = vshll.u32 %v700, %v707
        %v710 = vshrl.u32 %v692, %v708
        %v711 = vor.u32 %v709, %v710
        %v712 = vsub.s32 4294967266, %v707
        %v713 = vadd.s32 %v712, 127
        %v714 = vshll.u32 %v713, 23
        %v715 = vor.u32 4788187, %v714
        %v716 = vand.u32 2147483647, %v715
        %v718 = vcvt.s32.f32 %v711
        %v719 = vmul.f32 %v718, %v716
        %v720 = vxor.u32 %v719, 2147483648
        %v721 = vsel %vm638, %v720, %v719
        %v722 = vsub.s32 4, %v698
        %v723 = vsel %vm638, %v722, %v698
        %v724 = vsel %vm637, %v212, %v721
        %v725 = vsel %vm637, 0, %v723
        %v726 = vcosq.f32.pop %v724
        %v727 = vsinq.f32.pop %v724
        %vm728 = vweird.f32 %v212
        %v729 = vand.u32 %v725, 3
        %vm730 = vcmp.lt.s32.totalorder %v729, 2
        %vm731 = vcmp.eq.s32.totalorder %v729, 0
        %v732 = vxor.u32 %v727, 2147483648
        %v733 = vsel %vm731, %v726, %v732
        %vm734 = vcmp.eq.s32.totalorder %v729, 2
        %v735 = vxor.u32 %v726, 2147483648
        %v736 = vsel %vm734, %v735, %v727
        %v737 = vsel %vm730, %v733, %v736
        %v738 = vsel %vm728, nan, %v737
        %v739 = vand.u32 2147483647, %v213
        %vm740 = vcmp.le.f32.partialorder %v739, 0.7853982
        %vm741 = vcmp.lt.s32.totalorder %v213, 0
        %v742 = vand.u32 %v213, 2139095040
        %v743 = vshrl.u32 %v742, 23
        %v744 = vsub.s32 %v743, 127
        %v745 = vand.u32 2147483647, %v213
        %v746 = vand.u32 %v745, 8388607
        %v747 = vor.u32 %v746, 8388608
        %v748 = vsub.s32 0, %v747
        %v749 = vadd.s32 %v744, 1
        %vm750 = vcmp.gt.s32.totalorder %v749, 0
        %v751 = vsel %vm750, %v749, 0
        %v752 = vshrl.u32 %v751, 5
        %v753 = vand.u32 %v751, 31
        %v754 = vsub.s32 32, %v753
        %v755 = vshrl.u32 683565275, %v754
        %v756 = vshll.u32 683565275, %v753
        %v757 = vshrl.u32 2475754826, %v754
        %v758 = vor.u32 %v756, %v757
        %v759 = vshll.u32 2475754826, %v753
        %v760 = vshrl.u32 2131351028, %v754
        %v761 = vor.u32 %v759, %v760
        %v762 = vshll.u32 2131351028, %v753
        %v763 = vshrl.u32 2102212464, %v754
        %v764 = vor.u32 %v762, %v763
        %v765 = vshll.u32 2102212464, %v753
        %v766 = vshrl.u32 920167782, %v754
        %v767 = vor.u32 %v765, %v766
        %v768 = vshll.u32 920167782, %v753
        %v769 = vshrl.u32 1326507024, %v754
        %v770 = vor.u32 %v768, %v769
        %vm771 = vcmp.lt.s32.totalorder %v752, 1
        %vm772 = vcmp.lt.s32.totalorder %v752, 2
        %vm773 = vcmp.lt.s32.totalorder %v752, 3
        %vm774 = vcmp.lt.s32.totalorder %v752, 4
        %v775 = vsel %vm771, %v755, %v758
        %v776 = vsel %vm774, %v764, 2102212464
        %v777 = vsel %vm773, %v761, %v776
        %v778 = vsel %vm772, %v775, %v777
        %v779 = vsel %vm771, %v758, %v761
        %v780 = vsel %vm774, %v767, 920167782
        %v781 = vsel %vm773, %v764, %v780
        %v782 = vsel %vm772, %v779, %v781
        %v783 = vsel %vm771, %v761, %v764
        %v784 = vsel %vm774, %v770, 1326507024
        %v785 = vsel %vm773, %v767, %v784
        %v786 = vsel %vm772, %v783, %v785
        %v787 = vshll.u32 %v747, 8
        %v788 = vmul.u32.u64.compose %v787, %v786
        %v789 = vextract.low.u32 %v788
        %v790 = vextract.high.u32 %v788
        %v791 = vmul.u32.u64.compose %v787, %v782
        %v792 = vextract.low.u32 %v791
        %v793 = vextract.high.u32 %v791
        %v794 = vmul.u32 %v787, %v778
        %v795 = vadd.s32 %v790, %v792
        %vm796 = vc.u32 %v790, %v792
        %v797 = vadd.s32 %v793, 1
        %v798 = vsel %vm796, %v797, %v793
        %v799 = vadd.s32 %v794, %v798
        %v800 = vadd.s32 %v799, 536870912
        %v801 = vshrl.u32 %v800, 30
        %v802 = vshll.u32 %v801, 30
        %v803 = vsub.s32 %v799, %v802
        %vm804 = vcmp.lt.s32.totalorder %v803, 0
        %v805 = vsub.s32 0, %v803
        %v806 = vsel %vm804, %v805, %v803
        %v807 = vclz %v806
        %v808 = vsub.s32 %v807, 2
        %vm809 = vcmp.gt.s32.totalorder 0, %v808
        %v810 = vsel %vm809, 0, %v808
        %v811 = vsub.s32 32, %v810
        %v812 = vshll.u32 %v803, %v810
        %v813 = vshrl.u32 %v795, %v811
        %v814 = vor.u32 %v812, %v813
        %v815 = vsub.s32 4294967266, %v810
        %v816 = vadd.s32 %v815, 127
        %v817 = vshll.u32 %v816, 23
        %v818 = vor.u32 4788187, %v817
        %v819 = vand.u32 2147483647, %v818
        %v821 = vcvt.s32.f32 %v814
        %v822 = vmul.f32 %v821, %v819
        %v823 = vxor.u32 %v822, 2147483648
        %v824 = vsel %vm741, %v823, %v822
        %v825 = vsub.s32 4, %v801
        %v826 = vsel %vm741, %v825, %v801
        %v827 = vsel %vm740, %v213, %v824
        %v828 = vsel %vm740, 0, %v826
        %v829 = vcosq.f32.pop %v827
        %v830 = vsinq.f32.pop %v827
        %vm831 = vweird.f32 %v213
        %v832 = vand.u32 %v828, 3
        %vm833 = vcmp.lt.s32.totalorder %v832, 2
        %vm834 = vcmp.eq.s32.totalorder %v832, 0
        %v835 = vxor.u32 %v830, 2147483648
        %v836 = vsel %vm834, %v829, %v835
        %vm837 = vcmp.eq.s32.totalorder %v832, 2
        %v838 = vxor.u32 %v829, 2147483648
        %v839 = vsel %vm837, %v838, %v830
        %v840 = vsel %vm833, %v836, %v839
        %v841 = vsel %vm831, nan, %v840
        %v842 = vand.u32 2147483647, %v214
        %vm843 = vcmp.le.f32.partialorder %v842, 0.7853982
        %vm844 = vcmp.lt.s32.totalorder %v214, 0
        %v845 = vand.u32 %v214, 2139095040
        %v846 = vshrl.u32 %v845, 23
        %v847 = vsub.s32 %v846, 127
        %v848 = vand.u32 2147483647, %v214
        %v849 = vand.u32 %v848, 8388607
        %v850 = vor.u32 %v849, 8388608
        %v851 = vsub.s32 0, %v850
        %v852 = vadd.s32 %v847, 1
        %vm853 = vcmp.gt.s32.totalorder %v852, 0
        %v854 = vsel %vm853, %v852, 0
        %v855 = vshrl.u32 %v854, 5
        %v856 = vand.u32 %v854, 31
        %v857 = vsub.s32 32, %v856
        %v858 = vshrl.u32 683565275, %v857
        %v859 = vshll.u32 683565275, %v856
        %v860 = vshrl.u32 2475754826, %v857
        %v861 = vor.u32 %v859, %v860
        %v862 = vshll.u32 2475754826, %v856
        %v863 = vshrl.u32 2131351028, %v857
        %v864 = vor.u32 %v862, %v863
        %v865 = vshll.u32 2131351028, %v856
        %v866 = vshrl.u32 2102212464, %v857
        %v867 = vor.u32 %v865, %v866
        %v868 = vshll.u32 2102212464, %v856
        %v869 = vshrl.u32 920167782, %v857
        %v870 = vor.u32 %v868, %v869
        %v871 = vshll.u32 920167782, %v856
        %v872 = vshrl.u32 1326507024, %v857
        %v873 = vor.u32 %v871, %v872
        %vm874 = vcmp.lt.s32.totalorder %v855, 1
        %vm875 = vcmp.lt.s32.totalorder %v855, 2
        %vm876 = vcmp.lt.s32.totalorder %v855, 3
        %vm877 = vcmp.lt.s32.totalorder %v855, 4
        %v878 = vsel %vm874, %v858, %v861
        %v879 = vsel %vm877, %v867, 2102212464
        %v880 = vsel %vm876, %v864, %v879
        %v881 = vsel %vm875, %v878, %v880
        %v882 = vsel %vm874, %v861, %v864
        %v883 = vsel %vm877, %v870, 920167782
        %v884 = vsel %vm876, %v867, %v883
        %v885 = vsel %vm875, %v882, %v884
        %v886 = vsel %vm874, %v864, %v867
        %v887 = vsel %vm877, %v873, 1326507024
        %v888 = vsel %vm876, %v870, %v887
        %v889 = vsel %vm875, %v886, %v888
        %v890 = vshll.u32 %v850, 8
        %v891 = vmul.u32.u64.compose %v890, %v889
        %v892 = vextract.low.u32 %v891
        %v893 = vextract.high.u32 %v891
        %v894 = vmul.u32.u64.compose %v890, %v885
        %v895 = vextract.low.u32 %v894
        %v896 = vextract.high.u32 %v894
        %v897 = vmul.u32 %v890, %v881
        %v898 = vadd.s32 %v893, %v895
        %vm899 = vc.u32 %v893, %v895
        %v900 = vadd.s32 %v896, 1
        %v901 = vsel %vm899, %v900, %v896
        %v902 = vadd.s32 %v897, %v901
        %v903 = vadd.s32 %v902, 536870912
        %v904 = vshrl.u32 %v903, 30
        %v905 = vshll.u32 %v904, 30
        %v906 = vsub.s32 %v902, %v905
        %vm907 = vcmp.lt.s32.totalorder %v906, 0
        %v908 = vsub.s32 0, %v906
        %v909 = vsel %vm907, %v908, %v906
        %v910 = vclz %v909
        %v911 = vsub.s32 %v910, 2
        %vm912 = vcmp.gt.s32.totalorder 0, %v911
        %v913 = vsel %vm912, 0, %v911
        %v914 = vsub.s32 32, %v913
        %v915 = vshll.u32 %v906, %v913
        %v916 = vshrl.u32 %v898, %v914
        %v917 = vor.u32 %v915, %v916
        %v918 = vsub.s32 4294967266, %v913
        %v919 = vadd.s32 %v918, 127
        %v920 = vshll.u32 %v919, 23
        %v921 = vor.u32 4788187, %v920
        %v922 = vand.u32 2147483647, %v921
        %v924 = vcvt.s32.f32 %v917
        %v925 = vmul.f32 %v924, %v922
        %v926 = vxor.u32 %v925, 2147483648
        %v927 = vsel %vm844, %v926, %v925
        %v928 = vsub.s32 4, %v904
        %v929 = vsel %vm844, %v928, %v904
        %v930 = vsel %vm843, %v214, %v927
        %v931 = vsel %vm843, 0, %v929
        %v932 = vcosq.f32.pop %v930
        %v933 = vsinq.f32.pop %v930
        %vm934 = vweird.f32 %v214
        %v935 = vand.u32 %v931, 3
        %vm936 = vcmp.lt.s32.totalorder %v935, 2
        %vm937 = vcmp.eq.s32.totalorder %v935, 0
        %v938 = vxor.u32 %v933, 2147483648
        %v939 = vsel %vm937, %v932, %v938
        %vm940 = vcmp.eq.s32.totalorder %v935, 2
        %v941 = vxor.u32 %v932, 2147483648
        %v942 = vsel %vm940, %v941, %v933
        %v943 = vsel %vm936, %v939, %v942
        %v944 = vsel %vm934, nan, %v943
        %v945 = vand.u32 2147483647, %v215
        %vm946 = vcmp.le.f32.partialorder %v945, 0.7853982
        %vm947 = vcmp.lt.s32.totalorder %v215, 0
        %v948 = vand.u32 %v215, 2139095040
        %v949 = vshrl.u32 %v948, 23
        %v950 = vsub.s32 %v949, 127
        %v951 = vand.u32 2147483647, %v215
        %v952 = vand.u32 %v951, 8388607
        %v953 = vor.u32 %v952, 8388608
        %v954 = vsub.s32 0, %v953
        %v955 = vadd.s32 %v950, 1
        %vm956 = vcmp.gt.s32.totalorder %v955, 0
        %v957 = vsel %vm956, %v955, 0
        %v958 = vshrl.u32 %v957, 5
        %v959 = vand.u32 %v957, 31
        %v960 = vsub.s32 32, %v959
        %v961 = vshrl.u32 683565275, %v960
        %v962 = vshll.u32 683565275, %v959
        %v963 = vshrl.u32 2475754826, %v960
        %v964 = vor.u32 %v962, %v963
        %v965 = vshll.u32 2475754826, %v959
        %v966 = vshrl.u32 2131351028, %v960
        %v967 = vor.u32 %v965, %v966
        %v968 = vshll.u32 2131351028, %v959
        %v969 = vshrl.u32 2102212464, %v960
        %v970 = vor.u32 %v968, %v969
        %v971 = vshll.u32 2102212464, %v959
        %v972 = vshrl.u32 920167782, %v960
        %v973 = vor.u32 %v971, %v972
        %v974 = vshll.u32 920167782, %v959
        %v975 = vshrl.u32 1326507024, %v960
        %v976 = vor.u32 %v974, %v975
        %vm977 = vcmp.lt.s32.totalorder %v958, 1
        %vm978 = vcmp.lt.s32.totalorder %v958, 2
        %vm979 = vcmp.lt.s32.totalorder %v958, 3
        %vm980 = vcmp.lt.s32.totalorder %v958, 4
        %v981 = vsel %vm977, %v961, %v964
        %v982 = vsel %vm980, %v970, 2102212464
        %v983 = vsel %vm979, %v967, %v982
        %v984 = vsel %vm978, %v981, %v983
        %v985 = vsel %vm977, %v964, %v967
        %v986 = vsel %vm980, %v973, 920167782
        %v987 = vsel %vm979, %v970, %v986
        %v988 = vsel %vm978, %v985, %v987
        %v989 = vsel %vm977, %v967, %v970
        %v990 = vsel %vm980, %v976, 1326507024
        %v991 = vsel %vm979, %v973, %v990
        %v992 = vsel %vm978, %v989, %v991
        %v993 = vshll.u32 %v953, 8
        %v994 = vmul.u32.u64.compose %v993, %v992
        %v995 = vextract.low.u32 %v994
        %v996 = vextract.high.u32 %v994
        %v997 = vmul.u32.u64.compose %v993, %v988
        %v998 = vextract.low.u32 %v997
        %v999 = vextract.high.u32 %v997
        %v1000 = vmul.u32 %v993, %v984
        %v1001 = vadd.s32 %v996, %v998
        %vm1002 = vc.u32 %v996, %v998
        %v1003 = vadd.s32 %v999, 1
        %v1004 = vsel %vm1002, %v1003, %v999
        %v1005 = vadd.s32 %v1000, %v1004
        %v1006 = vadd.s32 %v1005, 536870912
        %v1007 = vshrl.u32 %v1006, 30
        %v1008 = vshll.u32 %v1007, 30
        %v1009 = vsub.s32 %v1005, %v1008
        %vm1010 = vcmp.lt.s32.totalorder %v1009, 0
        %v1011 = vsub.s32 0, %v1009
        %v1012 = vsel %vm1010, %v1011, %v1009
        %v1013 = vclz %v1012
        %v1014 = vsub.s32 %v1013, 2
        %vm1015 = vcmp.gt.s32.totalorder 0, %v1014
        %v1016 = vsel %vm1015, 0, %v1014
        %v1017 = vsub.s32 32, %v1016
        %v1018 = vshll.u32 %v1009, %v1016
        %v1019 = vshrl.u32 %v1001, %v1017
        %v1020 = vor.u32 %v1018, %v1019
        %v1021 = vsub.s32 4294967266, %v1016
        %v1022 = vadd.s32 %v1021, 127
        %v1023 = vshll.u32 %v1022, 23
        %v1024 = vor.u32 4788187, %v1023
        %v1025 = vand.u32 2147483647, %v1024
        %v1027 = vcvt.s32.f32 %v1020
        %v1028 = vmul.f32 %v1027, %v1025
        %v1029 = vxor.u32 %v1028, 2147483648
        %v1030 = vsel %vm947, %v1029, %v1028
        %v1031 = vsub.s32 4, %v1007
        %v1032 = vsel %vm947, %v1031, %v1007
        %v1033 = vsel %vm946, %v215, %v1030
        %v1034 = vsel %vm946, 0, %v1032
        %v1035 = vcosq.f32.pop %v1033
        %v1036 = vsinq.f32.pop %v1033
        %vm1037 = vweird.f32 %v215
        %v1038 = vand.u32 %v1034, 3
        %vm1039 = vcmp.lt.s32.totalorder %v1038, 2
        %vm1040 = vcmp.eq.s32.totalorder %v1038, 0
        %v1041 = vxor.u32 %v1036, 2147483648
        %v1042 = vsel %vm1040, %v1035, %v1041
        %vm1043 = vcmp.eq.s32.totalorder %v1038, 2
        %v1044 = vxor.u32 %v1035, 2147483648
        %v1045 = vsel %vm1043, %v1044, %v1036
        %v1046 = vsel %vm1039, %v1042, %v1045
        %v1047 = vsel %vm1037, nan, %v1046
        %1048 = vst [vmem:[%s179 + $0x10] sm:$0xff] %v738
        %1049 = vst [vmem:[%s179 + $0x18] sm:$0xff] %v841
        %1050 = vst [vmem:[%s179 + $0x30] sm:$0xff] %v944
        %1051 = vst [vmem:[%s179 + $0x38] sm:$0xff] %v1047
        %s1052 = sand.u32 %s71, 1
        %s1053 = scalar_lea.sflag [#allocation4], %s1052
        %s1054 = sand.u32 %s71, 1
        %s1055 = smul.addr %s1054, 64
        %s1056 = scalar_lea.vmem [#allocation3], %s1055
        // Predicated region
        $region63: #{tpu_custom_call.1} parent=57 // pred_check
          %p1057 = pneg %p81
        $region64: #{tpu_custom_call.1} parent=57 // pred_check_branch
          %1059 = sbr.rel (%p1057) target = $region66
        $region65: #{tpu_custom_call.1} parent=57 // pred_region
          %s1061 = ssub.s32 1024, 1024
          %1062 = vsyncadd %s1053, %s1061
          %s1063 = smul.addr %s16, 128
          %s1064 = scalar_lea.hbm %s2, %s1063
          %s1065 = sshll.u32 %s1056, 4
          %s1066 = int_to_ptr.vmem [resolvable:$true] %s1065
          %1071 = dma.vmem_to_hbm [thread:$0]  %s1066, 1024, %s1064, %s1053, 128, 256, 8
        $region66: #{tpu_custom_call.1} parent=57 // pred_fallthru
          _
      $region58: #{tpu_custom_call.1} parent=5 // pred_fallthru
        _
      %p1072 = scmp.le.s32.totalorder 2, %s11
      // Predicated region
      $region67: #{tpu_custom_call.1} parent=5 // pred_check
        %p1073 = pneg %p1072
      $region68: #{tpu_custom_call.1} parent=5 // pred_check_branch
        %1075 = sbr.rel (%p1073) target = $region70
      $region69: #{tpu_custom_call.1} parent=5 // pred_region
        %s1076 = ssub.s32 %s11, 2
        // Predicated region
        $region71: #{tpu_custom_call.1} parent=69 // pred_check
          %p1077 = pneg %p87
        $region72: #{tpu_custom_call.1} parent=69 // pred_check_branch
          %1079 = sbr.rel (%p1077) target = $region74
        $region73: #{tpu_custom_call.1} parent=69 // pred_region
          %s1080 = sand.u32 %s72, 1
          %s1081 = scalar_lea.sflag [#allocation4], %s1080
          %s1082 = sand.u32 %s72, 1
          %s1083 = smul.addr %s1082, 64
          %s1084 = scalar_lea.vmem [#allocation3], %s1083
          %1085 = dma.done %s1081, 1024
        $region74: #{tpu_custom_call.1} parent=69 // pred_fallthru
          _
      $region70: #{tpu_custom_call.1} parent=5 // pred_fallthru
        _
    $region6: #{tpu_custom_call.1} parent=1 // loop_footer
      %s15 = sadd.s32 1, %s11
    $region7: #{tpu_custom_call.1} parent=1 // loop_footer_branch
      %10 = sbr.rel target = $region3
    $region8: #{tpu_custom_call.1} parent=1 // loop_exit
      _
    %1086 = vsyncpa [#allocation4], 1
    %s1087 = scalar_lea.sflag [#allocation4], 1
    %1088 = vsyncpa %s1087, 1

</llo_original>
